<compile_context>
chip_gen: v6e
topology: v6e:2x2x1
jax: 0.10.0
libtpu: 0.0.40
codegen_flags: <defaults>
</compile_context>

<pallas_src>
import functools
import math

import jax
import jax.numpy as jnp
from jax.experimental import pallas as pl
from jax.experimental.pallas import tpu as pltpu

_LOGIT_P25 = math.log(0.25 / 0.75)   # logit of the 0.25 eval threshold


def _rationale_kernel(bias_ref, x_ref, w_ref, *rest, training):
    if training:
        u_ref, z_ref, lp_ref, ent_ref = rest
    else:
        z_ref, lp_ref, ent_ref = rest

    # x may arrive as bf16 (bandwidth win); do the H-reduction in f32.
    x = x_ref[...].astype(jnp.float32)                 # (Bb, T, H)
    w = w_ref[...].astype(jnp.float32)                 # (1, H) -> broadcasts

    # Lane-dense logits: reduce over H (lane axis of x) -> (Bb, T), T on lanes.
    # NOTE: on v7x with small H (< ~384) this lane reduce can make the XLU the
    # binding slot; if a bundle dump confirms that, reformulate as an MXU
    # dot_general on a (Bb*T, H) view.
    logits = jnp.sum(x * w, axis=-1) + bias_ref[0]     # (Bb, T) f32

    # Stable softplus pair (3 EUP ops/elem total: exp, log1p, exp):
    #   sp_pos = softplus(logits); sp_neg = softplus(-logits); p = sigmoid(logits)
    sp_pos = jnp.maximum(logits, 0.0) + jnp.log1p(jnp.exp(-jnp.abs(logits)))
    sp_neg = sp_pos - logits
    probs = jnp.exp(-sp_neg)

    if training:
        # z ~ Bernoulli(p): z = 1{u < p}, u ~ U[0,1) streamed in from the host
        # PRNG (torch's RNG stream cannot be reproduced bit-exactly anyway).
        z = (u_ref[...] < probs).astype(jnp.float32)
    else:
        # Eval: z = 1{p > 0.25} == 1{logits > logit(0.25)} — off the EUP chain.
        z = (logits > _LOGIT_P25).astype(jnp.float32)

    # Bernoulli log_prob / entropy, algebraic (stable) forms:
    #   log_prob(z) = z*logits - softplus(logits)
    #   entropy     = softplus(logits) - p*logits
    log_prob = z * logits - sp_pos                     # (Bb, T)
    entropy = sp_pos - probs * logits                  # (Bb, T)

    z_ref[...] = z.astype(z_ref.dtype)                               # (Bb, T)
    lp_ref[...] = jnp.mean(log_prob, axis=-1, keepdims=True)         # (Bb, 1)
    ent_ref[...] = jnp.mean(entropy, axis=-1, keepdims=True)         # (Bb, 1)


def _round_up(x, m):
    return ((x + m - 1) // m) * m


def _pick_block_b(B, T, H, itemsize, budget_bytes=16 << 20):
    """Batch rows per grid step.

    Bb must be a multiple of 8 (sublane dim of the (Bb, T) / (Bb, 1) out
    blocks) unless it equals B.  The grid uses cdiv(B, Bb), so Bb does NOT
    need to divide B (Pallas masks the ragged last block).  When B > 8 we
    guarantee at least 2 grid steps so the "parallel" batch-block axis can
    shard across both v7x TensorCores.
    """
    per_row = max(1, T * H * itemsize)
    max_rows = max(8, int(budget_bytes) // per_row)
    if B <= 8:
        return B                                    # tiny batch: one full block
    Bb = min(max_rows, _round_up(-(-B // 2), 8))    # >= 2 steps, <= VMEM budget
    Bb = max(8, (Bb // 8) * 8)                      # multiple of 8
    return min(Bb, _round_up(B, 8))


def _vmem_limit_bytes(Bb, T, H, x_itemsize, training):
    x_tile = Bb * T * H * x_itemsize
    u_tile = Bb * T * 4 if training else 0
    z_tile = Bb * T * 4
    need = 2 * (x_tile + u_tile + z_tile) + (1 << 20)   # double-buffered + slack
    # Cap at 56 MiB: safely under v7x's 64 MiB per-TC VMEM, ample on v5e/v6e.
    return int(min(max(need + (8 << 20), 32 << 20), 56 << 20))


def rationale_forward(x, w, b, key=None, *, training=False):
    """Returns (z, log_prob, entropy) matching RationaleWrapper.forward.

    x: (B, T, H) f32 or bf16   w: (1, H) (torch Linear(H,1).weight layout)
    b: (1,) f32                key: jax PRNG key (required when training=True)
    """
    B, T, H = x.shape
    itemsize = jnp.dtype(x.dtype).itemsize
    Bb = _pick_block_b(B, T, H, itemsize)
    grid = (pl.cdiv(B, Bb),)
    # torch: sample() is float; where(...,1,0) is int (int32 here vs torch int64).
    z_dtype = jnp.float32 if training else jnp.int32
    kernel = functools.partial(_rationale_kernel, training=training)

    in_specs = [
        pl.BlockSpec(memory_space=pltpu.MemorySpace.SMEM),   # bias (1,) f32
        pl.BlockSpec((Bb, T, H), lambda i: (i, 0, 0)),       # x
        pl.BlockSpec((1, H), lambda i: (0, 0)),              # agent weight
    ]
    args = [b, x, w]
    if training:
        if key is None:
            raise ValueError("training=True requires a PRNG key")
        u = jax.random.uniform(key, (B, T), jnp.float32)     # portable PRNG
        in_specs.append(pl.BlockSpec((Bb, T), lambda i: (i, 0)))
        args.append(u)

    z2, lp2, ent2 = pl.pallas_call(
        kernel,
        grid=grid,
        in_specs=in_specs,
        out_specs=(
            pl.BlockSpec((Bb, T), lambda i: (i, 0)),         # z (lane-dense)
            pl.BlockSpec((Bb, 1), lambda i: (i, 0)),         # log_prob
            pl.BlockSpec((Bb, 1), lambda i: (i, 0)),         # entropy
        ),
        out_shape=(
            jax.ShapeDtypeStruct((B, T), z_dtype),
            jax.ShapeDtypeStruct((B, 1), jnp.float32),
            jax.ShapeDtypeStruct((B, 1), jnp.float32),
        ),
        compiler_params=pltpu.CompilerParams(
            dimension_semantics=("parallel",),
            vmem_limit_bytes=_vmem_limit_bytes(Bb, T, H, itemsize, training),
        ),
    )(*args)
    return z2, lp2[:, 0], ent2[:, 0]


if __name__ == "__main__":
    # TODO(synk): for production T/H not multiples of 128, pad in the wrapper so
    # the lane-dense z store stays unmasked and x tiles stay lane-full.
    B, T, H = 2, 8, 32
    key = jax.random.PRNGKey(0)
    kx, kw, kb, ks = jax.random.split(key, 4)

    # Deterministic inputs + agent (Linear(H, 1)) parameters.
    x = jax.random.normal(kx, (B, T, H), jnp.float32)
    bound = 1.0 / float(H) ** 0.5
    w = jax.random.uniform(kw, (1, H), jnp.float32, -bound, bound)
    b = jax.random.uniform(kb, (1,), jnp.float32, -bound, bound)

    # Pure-JAX reference pieces.
    logits_r = x @ w[0] + b[0]                              # (B, T)
    probs_r = jax.nn.sigmoid(logits_r)
    z_r = probs_r > 0.25
    lp_r = (z_r * jax.nn.log_sigmoid(logits_r)
            + (1.0 - z_r) * jax.nn.log_sigmoid(-logits_r)).mean(axis=1)
    ent_r = (probs_r * jax.nn.softplus(-logits_r)
             + (1.0 - probs_r) * jax.nn.softplus(logits_r)).mean(axis=1)

    # Eval path (deterministic).
    z, log_prob, entropy = rationale_forward(x, w, b, training=False)
    jax.block_until_ready((z, log_prob, entropy))
    assert z.shape == (B, T) and log_prob.shape == (B,) and entropy.shape == (B,)
    assert jnp.array_equal(z, z_r.astype(jnp.int32))
    assert jnp.allclose(log_prob, lp_r, atol=1e-5)
    assert jnp.allclose(entropy, ent_r, atol=1e-5)

    # Training path (stochastic Bernoulli sample): check self-consistency.
    z_t, lp_t, ent_t = rationale_forward(x, w, b, key=ks, training=True)
    jax.block_until_ready((z_t, lp_t, ent_t))
    assert z_t.shape == (B, T) and z_t.dtype == jnp.float32
    assert bool(jnp.all((z_t == 0.0) | (z_t == 1.0)))
    lp_t_ref = (z_t * logits_r - jax.nn.softplus(logits_r)).mean(axis=1)
    assert jnp.allclose(lp_t, lp_t_ref, atol=1e-5)
    assert jnp.allclose(ent_t, ent_r, atol=1e-5)

    # bf16-activation smoke check (halves the HBM read the kernel is bound on).
    z_b, lp_b, ent_b = rationale_forward(x.astype(jnp.bfloat16), w, b, training=False)
    jax.block_until_ready((z_b, lp_b, ent_b))
    assert z_b.shape == (B, T)
    assert bool(jnp.all(jnp.isfinite(lp_b))) and bool(jnp.all(jnp.isfinite(ent_b)))

    print("KERNEL_OK")
</pallas_src>

<mosaic_0001>
module attributes {stable_mosaic.version = 11 : i64} {
  func.func @_rationale_kernel(%arg0: i32, %arg1: memref<1xf32, #tpu.memory_space<smem>>, %arg2: memref<2x8x32xf32, #tpu.memory_space<vmem>>, %arg3: memref<1x32xf32, #tpu.memory_space<vmem>>, %arg4: memref<2x8xi32, #tpu.memory_space<vmem>>, %arg5: memref<2x1xf32, #tpu.memory_space<vmem>>, %arg6: memref<2x1xf32, #tpu.memory_space<vmem>>) attributes {dimension_semantics = [#tpu.dimension_semantics<parallel>], iteration_bounds = array<i64: 1>, scalar_prefetch = 0 : i64, scratch_operands = 0 : i64, tpu.core_type = #tpu.core_type<tc>, window_params = [{transform_indices = @transform_0, window_bounds = array<i64: 1>}, {transform_indices = @transform_1, window_bounds = array<i64: 2, 8, 32>}, {pipeline_mode = #tpu.pipeline_mode<synchronous>, transform_indices = @transform_2, window_bounds = array<i64: 1, 32>}, {transform_indices = @transform_3, window_bounds = array<i64: 2, 8>}, {transform_indices = @transform_4, window_bounds = array<i64: 2, 1>}, {transform_indices = @transform_5, window_bounds = array<i64: 2, 1>}]} {
    %c0 = arith.constant 0 : index
    %c0_0 = arith.constant 0 : index
    %c0_1 = arith.constant 0 : index
    %0 = vector.load %arg2[%c0, %c0_0, %c0_1] : memref<2x8x32xf32, #tpu.memory_space<vmem>>, vector<2x8x32xf32>
    %c0_2 = arith.constant 0 : index
    %c0_3 = arith.constant 0 : index
    %1 = vector.load %arg3[%c0_2, %c0_3] : memref<1x32xf32, #tpu.memory_space<vmem>>, vector<1x32xf32>
    %2 = vector.shape_cast %1 : vector<1x32xf32> to vector<1x1x32xf32>
    %3 = vector.broadcast %2 : vector<1x1x32xf32> to vector<2x8x32xf32>
    %4 = arith.mulf %0, %3 : vector<2x8x32xf32>
    %cst = arith.constant dense<0.000000e+00> : vector<2x8xf32>
    %5 = vector.multi_reduction <add>, %4, %cst [2] : vector<2x8x32xf32> to vector<2x8xf32>
    %c0_4 = arith.constant 0 : index
    %6 = memref.load %arg1[%c0_4] : memref<1xf32, #tpu.memory_space<smem>>
    %7 = vector.broadcast %6 : f32 to vector<2x8xf32>
    %8 = arith.addf %5, %7 : vector<2x8xf32>
    %cst_5 = arith.constant 0.000000e+00 : f32
    %9 = vector.broadcast %cst_5 : f32 to vector<2x8xf32>
    %10 = arith.maximumf %8, %9 : vector<2x8xf32>
    %11 = math.absf %8 : vector<2x8xf32>
    %cst_6 = arith.constant 0.000000e+00 : f32
    %12 = vector.broadcast %cst_6 : f32 to vector<2x8xf32>
    %13 = arith.subf %12, %11 : vector<2x8xf32>
    %14 = math.exp %13 : vector<2x8xf32>
    %15 = math.log1p %14 : vector<2x8xf32>
    %16 = arith.addf %10, %15 : vector<2x8xf32>
    %17 = arith.subf %16, %8 : vector<2x8xf32>
    %cst_7 = arith.constant 0.000000e+00 : f32
    %18 = vector.broadcast %cst_7 : f32 to vector<2x8xf32>
    %19 = arith.subf %18, %17 : vector<2x8xf32>
    %20 = math.exp %19 : vector<2x8xf32>
    %cst_8 = arith.constant -1.09861231 : f32
    %21 = vector.broadcast %cst_8 : f32 to vector<2x8xf32>
    %22 = arith.cmpf ogt, %8, %21 : vector<2x8xf32>
    %23 = arith.extui %22 : vector<2x8xi1> to vector<2x8xi32>
    %24 = arith.sitofp %23 : vector<2x8xi32> to vector<2x8xf32>
    %25 = arith.mulf %24, %8 : vector<2x8xf32>
    %26 = arith.subf %25, %16 : vector<2x8xf32>
    %27 = arith.mulf %20, %8 : vector<2x8xf32>
    %28 = arith.subf %16, %27 : vector<2x8xf32>
    %29 = arith.fptosi %24 : vector<2x8xf32> to vector<2x8xi32>
    %c0_9 = arith.constant 0 : index
    %c0_10 = arith.constant 0 : index
    %30 = vector.load %arg4[%c0_9, %c0_10] : memref<2x8xi32, #tpu.memory_space<vmem>>, vector<2x8xi32>
    tpu.vector_store %arg4[%c0_9, %c0_10], %29 {strides = array<i32>} : memref<2x8xi32, #tpu.memory_space<vmem>>, vector<2x8xi32>,
    %cst_11 = arith.constant dense<0.000000e+00> : vector<2xf32>
    %31 = vector.multi_reduction <add>, %26, %cst_11 [1] : vector<2x8xf32> to vector<2xf32>
    %32 = vector.shape_cast %31 : vector<2xf32> to vector<2x1xf32>
    %cst_12 = arith.constant 8.000000e+00 : f32
    %33 = vector.broadcast %cst_12 : f32 to vector<2x1xf32>
    %34 = arith.divf %32, %33 : vector<2x1xf32>
    %c0_13 = arith.constant 0 : index
    %c0_14 = arith.constant 0 : index
    %35 = vector.load %arg5[%c0_13, %c0_14] : memref<2x1xf32, #tpu.memory_space<vmem>>, vector<2x1xf32>
    tpu.vector_store %arg5[%c0_13, %c0_14], %34 {strides = array<i32>} : memref<2x1xf32, #tpu.memory_space<vmem>>, vector<2x1xf32>,
    %cst_15 = arith.constant dense<0.000000e+00> : vector<2xf32>
    %36 = vector.multi_reduction <add>, %28, %cst_15 [1] : vector<2x8xf32> to vector<2xf32>
    %37 = vector.shape_cast %36 : vector<2xf32> to vector<2x1xf32>
    %cst_16 = arith.constant 8.000000e+00 : f32
    %38 = vector.broadcast %cst_16 : f32 to vector<2x1xf32>
    %39 = arith.divf %37, %38 : vector<2x1xf32>
    %c0_17 = arith.constant 0 : index
    %c0_18 = arith.constant 0 : index
    %40 = vector.load %arg6[%c0_17, %c0_18] : memref<2x1xf32, #tpu.memory_space<vmem>>, vector<2x1xf32>
    tpu.vector_store %arg6[%c0_17, %c0_18], %39 {strides = array<i32>} : memref<2x1xf32, #tpu.memory_space<vmem>>, vector<2x1xf32>,
    return
  }
  func.func @transform_0(%arg0: i32) -> i32 {
    %c0_i32 = arith.constant 0 : i32
    %c0_i32_0 = arith.constant 0 : i32
    return %c0_i32 : i32
  }
  func.func @transform_1(%arg0: i32) -> (i32, i32, i32) {
    %c0_i32 = arith.constant 0 : i32
    %c0_i32_0 = arith.constant 0 : i32
    %c0_i32_1 = arith.constant 0 : i32
    return %arg0, %c0_i32, %c0_i32_0 : i32, i32, i32
  }
  func.func @transform_2(%arg0: i32) -> (i32, i32) {
    %c0_i32 = arith.constant 0 : i32
    %c0_i32_0 = arith.constant 0 : i32
    %c0_i32_1 = arith.constant 0 : i32
    return %c0_i32, %c0_i32_0 : i32, i32
  }
  func.func @transform_3(%arg0: i32) -> (i32, i32) {
    %c0_i32 = arith.constant 0 : i32
    %c0_i32_0 = arith.constant 0 : i32
    return %arg0, %c0_i32 : i32, i32
  }
  func.func @transform_4(%arg0: i32) -> (i32, i32) {
    %c0_i32 = arith.constant 0 : i32
    %c0_i32_0 = arith.constant 0 : i32
    return %arg0, %c0_i32 : i32, i32
  }
  func.func @transform_5(%arg0: i32) -> (i32, i32) {
    %c0_i32 = arith.constant 0 : i32
    %c0_i32_0 = arith.constant 0 : i32
    return %arg0, %c0_i32 : i32, i32
  }
}

</mosaic_0001>

<llo_original>
// kernel: tpu_custom_call.1
$region0: #{tpu_custom_call.1}
  #allocation0 [shape = 'u32[]', space=smem, size = 0x4, offset = 0x4, fixed_abs, tag = 'smem constant byte address 0x4 - core index']
  #allocation1 [shape = 'u32[144,128]{1,0:T(1,128)}', space=vmem, size = 0x12000, scoped, tag = 'internal scratch']
  #allocation2 [shape = 'f32[1]{0:T(128)S(6)}', space=smem, size = 0x200, scoped, tag = 'scoped memory for tpu_custom_call.1']
  %s0 = inlined_call_operand.<no memory space> [shape: f32[1], index: 0, kind: input, shape index: {}]
  %s1 = inlined_call_operand.hbm [shape: f32[2,8,32], index: 1, kind: input, shape index: {}]
  %s2 = inlined_call_operand.vmem [shape: f32[1,32], index: 2, kind: input, shape index: {}]
  %s3 = inlined_call_operand.hbm [shape: s32[2,8], index: 3, kind: output, shape index: {0}]
  %s4 = inlined_call_operand.vmem [shape: f32[2,1], index: 4, kind: output, shape index: {1}]
  %s5 = inlined_call_operand.vmem [shape: f32[2,1], index: 5, kind: output, shape index: {2}]
  %6 = xla_tuple %s3, %s4, %s5
  %s7 = sld [smem:[#allocation0]]
  $region42: #{tpu_custom_call.1} parent=0
    _
  %s9 = ssub.s32 1, %s7
  %s10 = scalar_select 0, %s9, %s7
  %11 = sst [smem:[#allocation2]] %s0
  $region1: #{tpu_custom_call.1} parent=0
    #allocation3 [shape = 'u8[8192]{0}', space=vmem, size = 0x2000, scoped, tag = 'input window, operand 1, single buffered']
    #allocation4 [shape = 's32[1]{0}', space=sflag, size = 0x4, scoped, tag = 'scoped memory for tpu_custom_call.1']
    #allocation5 [shape = 's32[1]{0}', space=sflag, size = 0x4, scoped, tag = 'scoped memory for tpu_custom_call.1']
    #allocation6 [shape = 'u8[1024]{0}', space=vmem, size = 0x400, scoped, tag = 'output window, operand 0, single buffered']
    %12 = vsyncpa [#allocation4], 0
    %13 = vsyncpa [#allocation5], 0
    // Predicated region
    $region2: #{tpu_custom_call.1} parent=1 // pred_check
      _
    $region3: #{tpu_custom_call.1} parent=1 // pred_check_branch
      %15 = sbr.rel (0) target = $region5
    $region4: #{tpu_custom_call.1} parent=1 // pred_region
      _
    $region5: #{tpu_custom_call.1} parent=1 // pred_fallthru
      _
    // Predicated region
    $region6: #{tpu_custom_call.1} parent=1 // pred_check
      _
    $region7: #{tpu_custom_call.1} parent=1 // pred_check_branch
      %17 = sbr.rel (0) target = $region9
    $region8: #{tpu_custom_call.1} parent=1 // pred_region
      %s19 = ssub.s32 256, 256
      %20 = vsyncadd [#allocation4], %s19
      %s21 = sshll.u32 [#allocation3], 4
      %s22 = int_to_ptr.vmem [resolvable:$true] %s21
      %27 = dma.hbm_to_vmem [thread:$0]  %s1, 256, %s22, [#allocation4], 128, 128, 8
    $region9: #{tpu_custom_call.1} parent=1 // pred_fallthru
      _
    // Predicated region
    $region10: #{tpu_custom_call.1} parent=1 // pred_check
      _
    $region11: #{tpu_custom_call.1} parent=1 // pred_check_branch
      %29 = sbr.rel (0) target = $region13
    $region12: #{tpu_custom_call.1} parent=1 // pred_region
      _
    $region13: #{tpu_custom_call.1} parent=1 // pred_fallthru
      _
    // Predicated region
    $region14: #{tpu_custom_call.1} parent=1 // pred_check
      _
    $region15: #{tpu_custom_call.1} parent=1 // pred_check_branch
      %31 = sbr.rel (0) target = $region17
    $region16: #{tpu_custom_call.1} parent=1 // pred_region
      %32 = dma.done [#allocation4], 256
    $region17: #{tpu_custom_call.1} parent=1 // pred_fallthru
      _
    %v33 = vld [vmem:[#allocation3] sm:$0xff]
    %v34 = vld [vmem:[#allocation3 + $0x8] sm:$0xff]
    %v35 = vld [vmem:[%s2] sm:$0x1]
    %v37 = vlaneseq
    %v38 = vshrl.u32 %v37, 7
    %v39 = vsub.s32 0, %v38
    %v40 = vrot.slane %v35, %v39
    %v42 = vmul.f32 %v33, %v40
    %v43 = vmul.f32 %v34, %v40
    %vm44 = vcmask 261120
    %v45 = vsel %vm44, %v42, 0.0
    %46 = vadd.xlane.f32.xlu0 %v45
    %v47 = vpop.xlane.xlu0 %46
    %v48 = vsel %vm44, %v43, 0.0
    %49 = vadd.xlane.f32.xlu0 %v48
    %v50 = vpop.xlane.xlu0 %49
    %s51 = sld [smem:[#allocation2]]
    %v52 = vstv %s51
    %v53 = vadd.f32 %v47, %v52
    %v54 = vadd.f32 %v50, %v52
    %v55 = vmax.f32 %v53, 0.0
    %v56 = vmax.f32 %v54, 0.0
    %v57 = vand.u32 2147483647, %v53
    %v58 = vand.u32 2147483647, %v54
    %v59 = vsub.f32 0.0, %v57
    %v60 = vsub.f32 0.0, %v58
    %v61 = vmul.f32 %v59, 1.442695
    %v62 = vpow.pop %v61
    %v63 = vmul.f32 %v60, 1.442695
    %v64 = vpow.pop %v63
    %v65 = vadd.f32 %v62, 1.0
    %v66 = vlog2.pop %v65
    %v67 = vmul.f32 %v66, 0.6931472
    %v68 = vmul.f32 -0.5, %v62
    %v69 = vadd.f32 %v68, 1.0
    %v70 = vmul.f32 %v69, %v62
    %v71 = vand.u32 2147483647, %v62
    %vm72 = vcmp.lt.f32.partialorder %v71, 0.0004427343
    %v73 = vsel %vm72, %v70, %v67
    %v74 = vadd.f32 %v64, 1.0
    %v75 = vlog2.pop %v74
    %v76 = vmul.f32 %v75, 0.6931472
    %v77 = vmul.f32 -0.5, %v64
    %v78 = vadd.f32 %v77, 1.0
    %v79 = vmul.f32 %v78, %v64
    %v80 = vand.u32 2147483647, %v64
    %vm81 = vcmp.lt.f32.partialorder %v80, 0.0004427343
    %v82 = vsel %vm81, %v79, %v76
    %v83 = vadd.f32 %v55, %v73
    %v84 = vadd.f32 %v56, %v82
    %v85 = vsub.f32 %v83, %v53
    %v86 = vsub.f32 %v84, %v54
    %v87 = vsub.f32 0.0, %v85
    %v88 = vsub.f32 0.0, %v86
    %v89 = vmul.f32 %v87, 1.442695
    %v90 = vpow.pop %v89
    %v91 = vmul.f32 %v88, 1.442695
    %v92 = vpow.pop %v91
    %vm93 = vcmp.gt.f32.partialorder %v53, -1.0986123
    %vm94 = vcmp.gt.f32.partialorder %v54, -1.0986123
    %v95 = vsel %vm93, 1, 0
    %v96 = vsel %vm94, 1, 0
    %v97 = vcvt.s32.f32 %v95
    %v98 = vcvt.s32.f32 %v96
    %v99 = vmul.f32 %v97, %v53
    %v100 = vmul.f32 %v98, %v54
    %v101 = vsub.f32 %v99, %v83
    %v102 = vsub.f32 %v100, %v84
    %v103 = vmul.f32 %v90, %v53
    %v104 = vmul.f32 %v92, %v54
    %v105 = vsub.f32 %v83, %v103
    %v106 = vsub.f32 %v84, %v104
    %v107 = vcvt.f32.s32.to.zero.pseudo %v97
    %v108 = vcvt.f32.s32.to.zero.pseudo %v98
    %v109 = vlaneseq
    %v110 = vand.u32 %v109, 127
    %v111 = vlaneseq
    %v112 = vshrl.u32 %v111, 7
    %v113 = vsub.s32 %v110, %v112
    %v114 = vrot.slane %v107, %v113
    %v115 = vlaneseq
    %v116 = vshrl.u32 %v115, 7
    %v117 = vsub.s32 %v110, %v116
    %v118 = vrot.slane %v108, %v117
    %vm119 = vcmask 1041409
    %v120 = vsel %vm119, %v118, %v114
    %vm121 = vcmask 58368
    %122 = vst.msk [vmem:[#allocation6] sm:$0x3] %vm121, %v120
    %v125 = vlaneseq
    %v126 = vshrl.u32 %v125, 7
    %v127 = vsub.s32 %v110, %v126
    %v128 = vrot.slane %v101, %v127
    %v129 = vlaneseq
    %v130 = vshrl.u32 %v129, 7
    %v131 = vsub.s32 %v110, %v130
    %v132 = vrot.slane %v102, %v131
    %v133 = vsel %vm119, %v132, %v128
    %v135 = vsel %vm121, %v133, 0.0
    %136 = vadd.xlane.f32.xlu0 %v135
    %v137 = vpop.xlane.xlu0 %136
    %v138 = vrcp.pop 8.0
    %v139 = vmul.f32 %v137, %v138
    %vm140 = vcmask 1024
    %141 = vst.msk [vmem:[%s4] sm:$0x3] %vm140, %v139
    %v144 = vlaneseq
    %v145 = vshrl.u32 %v144, 7
    %v146 = vsub.s32 %v110, %v145
    %v147 = vrot.slane %v105, %v146
    %v148 = vlaneseq
    %v149 = vshrl.u32 %v148, 7
    %v150 = vsub.s32 %v110, %v149
    %v151 = vrot.slane %v106, %v150
    %v152 = vsel %vm119, %v151, %v147
    %v154 = vsel %vm121, %v152, 0.0
    %155 = vadd.xlane.f32.xlu0 %v154
    %v156 = vpop.xlane.xlu0 %155
    %v157 = vmul.f32 %v156, %v138
    %158 = vst.msk [vmem:[%s5] sm:$0x3] %vm140, %v157
    // Predicated region
    $region18: #{tpu_custom_call.1} parent=1 // pred_check
      _
    $region19: #{tpu_custom_call.1} parent=1 // pred_check_branch
      %160 = sbr.rel (0) target = $region21
    $region20: #{tpu_custom_call.1} parent=1 // pred_region
      %s162 = ssub.s32 32, 32
      %163 = vsyncadd [#allocation5], %s162
      %s165 = sshll.u32 [#allocation6], 4
      %s166 = int_to_ptr.vmem [resolvable:$true] %s165
      %168 = dma.vmem_to_hbm [thread:$0]  %s166, 32, %s3, [#allocation5]
    $region21: #{tpu_custom_call.1} parent=1 // pred_fallthru
      _
    // Predicated region
    $region22: #{tpu_custom_call.1} parent=1 // pred_check
      _
    $region23: #{tpu_custom_call.1} parent=1 // pred_check_branch
      %170 = sbr.rel (0) target = $region25
    $region24: #{tpu_custom_call.1} parent=1 // pred_region
      _
    $region25: #{tpu_custom_call.1} parent=1 // pred_fallthru
      _
    // Predicated region
    $region26: #{tpu_custom_call.1} parent=1 // pred_check
      _
    $region27: #{tpu_custom_call.1} parent=1 // pred_check_branch
      %172 = sbr.rel (0) target = $region29
    $region28: #{tpu_custom_call.1} parent=1 // pred_region
      _
    $region29: #{tpu_custom_call.1} parent=1 // pred_fallthru
      _
    // Predicated region
    $region30: #{tpu_custom_call.1} parent=1 // pred_check
      _
    $region31: #{tpu_custom_call.1} parent=1 // pred_check_branch
      %174 = sbr.rel (0) target = $region33
    $region32: #{tpu_custom_call.1} parent=1 // pred_region
      %175 = dma.done [#allocation5], 32
    $region33: #{tpu_custom_call.1} parent=1 // pred_fallthru
      _
    // Predicated region
    $region34: #{tpu_custom_call.1} parent=1 // pred_check
      _
    $region35: #{tpu_custom_call.1} parent=1 // pred_check_branch
      %177 = sbr.rel (0) target = $region37
    $region36: #{tpu_custom_call.1} parent=1 // pred_region
      _
    $region37: #{tpu_custom_call.1} parent=1 // pred_fallthru
      _
    // Predicated region
    $region38: #{tpu_custom_call.1} parent=1 // pred_check
      _
    $region39: #{tpu_custom_call.1} parent=1 // pred_check_branch
      %179 = sbr.rel (0) target = $region41
    $region40: #{tpu_custom_call.1} parent=1 // pred_region
      _
    $region41: #{tpu_custom_call.1} parent=1 // pred_fallthru
      _
    %180 = vsyncpa [#allocation4], 1
    %181 = vsyncpa [#allocation5], 1

</llo_original>
